<compile_context>
chip_gen: v6e
topology: v6e:2x2x1
jax: 0.10.0
libtpu: 0.0.40
codegen_flags: <defaults>
</compile_context>

<pallas_src>
import functools

import jax
import jax.numpy as jnp
from jax import lax
from jax.experimental import pallas as pl
from jax.experimental.pallas import tpu as pltpu

_PAD = 2  # 5x5 LoG -> reflect pad of 2

# Laplacian-of-Gaussian 5x5 template (from LoG.__init__), used by the reference.
_LOG_TMPL = (
    (-2.0, -4.0, -4.0, -4.0, -2.0),
    (-4.0,  0.0,  8.0,  0.0, -4.0),
    (-4.0,  8.0, 24.0,  8.0, -4.0),
    (-4.0,  0.0,  8.0,  0.0, -4.0),
    (-2.0, -4.0, -4.0, -4.0, -2.0),
)


def _set_loss_tile_kernel(x_ref, yp_ref, yh_ref, m_ref, out_ref, tail_ref,
                          *, th, w, c, h_valid, need_row_mask):
    """One row tile of the SeT loss.

    x_ref   : (th, W*C)       original image rows [i*th, i*th+th) (flattened HWC)
    yp_ref  : (th, (W+4)*C)   reflect-padded y, padded rows [i*th, i*th+th)
    yh_ref  : (8,  (W+4)*C)   8-row halo block: padded rows [i*th+th, i*th+th+8)
    m_ref   : (th, W)         anomaly mask rows
    out_ref : (1, 8, 128)     partial sums: row0=s_bg, row1=s_anm, row2=n_anm
    tail_ref: (16, (W+4)*C)   scratch holding padded rows [i*th+th-8, i*th+th+8)
    """
    wc = w * c
    wpc = (w + 2 * _PAD) * c

    # ---- mask channel-expansion on the (otherwise idle) MXU ----------------
    # mwc[i, j*c + ch] = m[i, j]; built via a tiny 0/1 expansion matrix so the
    # (H, W) mask never has to be materialized as (H, W*C) in HBM.
    lane = lax.broadcasted_iota(jnp.int32, (w, wc), 1)
    col = lax.broadcasted_iota(jnp.int32, (w, wc), 0)
    d = lane - col * c
    expand = ((d >= 0) & (d < c)).astype(jnp.float32)                  # (W, W*C)
    mwc = jnp.dot(m_ref[...], expand, preferred_element_type=jnp.float32)

    # ---- stitch ONLY the 4-row bottom halo (not the whole tile) ------------
    # tail_ref row s holds padded tile-local row (th - 8) + s.
    tail_ref[0:8, :] = yp_ref[th - 8:th, :]
    tail_ref[8:16, :] = yh_ref[...]

    def stencil(load):
        # load(k): padded rows shifted down by k, shape (nrows, wpc), k = 0..4.
        r0 = load(0)
        r1 = load(1)
        r2 = load(2)
        r3 = load(3)
        r4 = load(4)
        s04 = r0 + r4
        s13 = r1 + r3
        # column-symmetric vertical partials (template cols 0==4, 1==3)
        va = -2.0 * s04 - 4.0 * (s13 + r2)
        vb = 8.0 * r2 - 4.0 * s04
        vc = 24.0 * r2 + 8.0 * s13 - 4.0 * s04
        # horizontal combine: only 5 lane-offset windows (offsets k*c)
        log_y = (va[:, 0:wc]
                 + vb[:, c:c + wc]
                 + vc[:, 2 * c:2 * c + wc]
                 + vb[:, 3 * c:3 * c + wc]
                 + va[:, 4 * c:4 * c + wc])
        y_ctr = r2[:, 2 * c:2 * c + wc]     # the (unpadded) y values themselves
        return log_y, y_ctr

    def partial_sums(log_y, y_ctr, x_slab, m_slab, row0, nrows):
        diff = x_slab - y_ctr
        d2 = diff * diff
        l2 = log_y * log_y
        if need_row_mask:
            # rows >= H are alignment padding: exclude them explicitly from
            # BOTH sums (do not rely on the zero-padded mask alone).
            g_row = row0 + lax.broadcasted_iota(jnp.int32, (nrows, wc), 0)
            valid = g_row < h_valid
            d2 = jnp.where(valid, d2, 0.0)
            l2 = jnp.where(valid, l2, 0.0)
        am = m_slab * m_slab            # == m for binary masks; exact for soft masks
        bm = 1.0 - m_slab
        bm = bm * bm
        return jnp.sum(bm * d2), jnp.sum(am * l2)

    row0 = pl.program_id(0) * th
    nb = th - 4

    # body: output rows [0, th-4) read their padded rows straight from yp_ref
    log_b, yc_b = stencil(lambda k: yp_ref[k:k + nb, :])
    sbg_b, sanm_b = partial_sums(log_b, yc_b, x_ref[0:nb, :], mwc[0:nb, :],
                                 row0, nb)

    # tail: output rows [th-4, th) read their padded rows from the 16-row stitch
    log_t, yc_t = stencil(lambda k: tail_ref[4 + k:8 + k, :])
    sbg_t, sanm_t = partial_sums(log_t, yc_t, x_ref[nb:th, :], mwc[nb:th, :],
                                 row0 + nb, 4)

    s_bg = sbg_b + sbg_t
    s_anm = sanm_b + sanm_t
    n_anm = jnp.sum(m_ref[...])

    rows = lax.broadcasted_iota(jnp.int32, (8, 128), 0)
    out_ref[0, :, :] = jnp.where(rows == 0, s_bg,
                       jnp.where(rows == 1, s_anm,
                       jnp.where(rows == 2, n_anm, 0.0)))


def _vmem_limit_bytes():
    """~75% of physical VMEM: ~96 MiB on v5e/v6e (128 MiB), ~48 MiB on v7x (64 MiB)."""
    try:
        cap = int(pltpu.get_tpu_info().vmem_capacity_bytes)
    except Exception:
        cap = 64 * 1024 * 1024
    return min(int(cap * 0.75), 112 * 1024 * 1024)


def _choose_tile_rows(h2, w, c, vmem_limit):
    """Largest multiple-of-8 divisor of h2 whose real footprint fits ~half of VMEM."""
    wc = w * c
    wpc = (w + 2 * _PAD) * c
    # double-buffered x / padded-y / mask DMA buffers + live stencil slabs
    bytes_per_row = 4 * (2 * wc + 2 * wpc + 2 * w + 10 * wpc + 8 * wc)
    th = (int(vmem_limit * 0.5) // max(1, bytes_per_row)) // 8 * 8
    th = max(8, min(th, h2))
    # keep >= 2 tiles so the "parallel" grid axis can feed both v7x TensorCores
    if th >= h2 and h2 >= 16:
        th = max(8, (h2 // 2) // 8 * 8)
    while h2 % th != 0:
        th -= 8
    return th


@functools.partial(jax.jit, static_argnames=("lmda", "eps", "tile_rows"))
def set_loss(x, y, mask, *, lmda=0.5, eps=1e-6, tile_rows=None):
    """x, y: (H, W, C);  mask: (H, W).  Returns the scalar SeT loss."""
    h, w, c = x.shape
    wc = w * c
    wpc = (w + 2 * _PAD) * c

    xf = x.astype(jnp.float32).reshape(h, wc)    # free (H, W*C) view, no transpose
    mf = mask.astype(jnp.float32)                # (H, W); expanded over C in-kernel

    # The ONLY wrapper-side HBM pass over y: one reflect pad (rows & cols),
    # followed by a free (H+4, (W+4)*C) reshape.
    ypad = jnp.pad(y.astype(jnp.float32),
                   ((_PAD, _PAD), (_PAD, _PAD), (0, 0)), mode="reflect")
    ypad = ypad.reshape(h + 2 * _PAD, wpc)

    # Round rows up to a sublane multiple (no-op for typical image heights).
    h2 = ((h + 7) // 8) * 8
    if h2 != h:
        xf = jnp.pad(xf, ((0, h2 - h), (0, 0)))
        mf = jnp.pad(mf, ((0, h2 - h), (0, 0)))
    # Bottom rows so the last tile's 8-row halo block is addressable.
    ypad = jnp.pad(ypad, ((0, (h2 + 8) - (h + 2 * _PAD)), (0, 0)))

    vmem_limit = _vmem_limit_bytes()
    th = tile_rows if tile_rows is not None else _choose_tile_rows(h2, w, c, vmem_limit)
    assert th % 8 == 0 and h2 % th == 0, (th, h2)
    nt = h2 // th

    kernel = functools.partial(_set_loss_tile_kernel, th=th, w=w, c=c,
                               h_valid=h, need_row_mask=(h2 != h))

    grid_spec = pltpu.PrefetchScalarGridSpec(
        num_scalar_prefetch=0,
        grid=(nt,),
        in_specs=[
            pl.BlockSpec((th, wc), lambda i: (i, 0)),              # x rows
            pl.BlockSpec((th, wpc), lambda i: (i, 0)),             # padded y rows
            pl.BlockSpec((8, wpc),                                 # 8-row bottom halo
                         lambda i: ((i + 1) * (th // 8), 0)),
            pl.BlockSpec((th, w), lambda i: (i, 0)),               # mask rows
        ],
        out_specs=pl.BlockSpec((1, 8, 128), lambda i: (i, 0, 0)),
        scratch_shapes=[pltpu.VMEM((16, wpc), jnp.float32)],
    )

    parts = pl.pallas_call(
        kernel,
        out_shape=jax.ShapeDtypeStruct((nt, 8, 128), jnp.float32),
        grid_spec=grid_spec,
        compiler_params=pltpu.CompilerParams(
            dimension_semantics=("parallel",),
            vmem_limit_bytes=vmem_limit,
        ),
    )(xf, ypad, ypad, mf)

    s_bg = jnp.sum(parts[:, 0, 0])
    s_anm = jnp.sum(parts[:, 1, 0])
    n_anm = jnp.sum(parts[:, 2, 0])
    n_bg = jnp.float32(h * w) - n_anm
    # NOTE: like the original module, br_loss has no epsilon guard on num_bg.
    return s_bg / n_bg + lmda * s_anm / (n_anm + eps)


def _set_loss_ref(x, y, mask, *, lmda=0.5, eps=1e-6):
    """Pure-JAX literal reference (HWC, un-grouped LoG) for correctness check."""
    ypad = jnp.pad(y, ((_PAD, _PAD), (_PAD, _PAD), (0, 0)), mode="reflect")
    H, W, C = x.shape
    log_y = jnp.zeros((H, W, C), jnp.float32)
    for i in range(5):
        for j in range(5):
            log_y = log_y + _LOG_TMPL[i][j] * ypad[i:i + H, j:j + W, :]
    m3 = mask[:, :, None]
    num_anm = jnp.sum(mask)
    num_bg = jnp.sum(1.0 - mask)
    as_loss = jnp.sum((m3 * log_y) ** 2) / (num_anm + eps)
    br_loss = jnp.sum(((1.0 - m3) * (x - y)) ** 2) / num_bg
    return br_loss + lmda * as_loss


if __name__ == "__main__":
    key = jax.random.PRNGKey(0)
    kx, ky, km = jax.random.split(key, 3)

    H, W, C = 32, 32, 3
    x = jax.random.normal(kx, (H, W, C), dtype=jnp.float32)
    # decoder_outputs is a list; the module uses element 0
    decoder_outputs = [x + 0.1 * jax.random.normal(ky, (H, W, C), dtype=jnp.float32)]
    y = decoder_outputs[0]
    # binary anomaly mask (H, W)
    mask = (jax.random.uniform(km, (H, W)) > 0.8).astype(jnp.float32)

    lmda = 0.5
    ref = _set_loss_ref(x, y, mask, lmda=lmda)

    # multi-tile path (4 row tiles of 8 rows: exercises the halo stitch)
    loss = jax.block_until_ready(set_loss(x, y, mask, lmda=lmda, tile_rows=8))
    assert jnp.allclose(loss, ref, rtol=1e-4, atol=1e-5), (loss, ref)

    # auto-chosen tiling (>= 2 tiles so both v7x TensorCores would get work)
    loss2 = jax.block_until_ready(set_loss(x, y, mask, lmda=lmda))
    assert jnp.allclose(loss2, ref, rtol=1e-4, atol=1e-5), (loss2, ref)

    # ragged height (H % 8 != 0): exercises the padded-row masking path
    H3 = 30
    x3, y3, m3 = x[:H3], y[:H3], mask[:H3]
    ref3 = _set_loss_ref(x3, y3, m3, lmda=lmda)
    loss3 = jax.block_until_ready(set_loss(x3, y3, m3, lmda=lmda))
    assert jnp.allclose(loss3, ref3, rtol=1e-4, atol=1e-5), (loss3, ref3)

    print("KERNEL_OK")
</pallas_src>

<mosaic_0001>
module attributes {stable_mosaic.version = 11 : i64} {
  func.func @_set_loss_tile_kernel(%arg0: i32, %arg1: memref<8x96xf32, #tpu.memory_space<vmem>>, %arg2: memref<8x108xf32, #tpu.memory_space<vmem>>, %arg3: memref<8x108xf32, #tpu.memory_space<vmem>>, %arg4: memref<8x32xf32, #tpu.memory_space<vmem>>, %arg5: memref<1x8x128xf32, #tpu.memory_space<vmem>>, %arg6: memref<16x108xf32, #tpu.memory_space<vmem>>) attributes {dimension_semantics = [#tpu.dimension_semantics<parallel>], iteration_bounds = array<i64: 4>, scalar_prefetch = 0 : i64, scratch_operands = 1 : i64, tpu.core_type = #tpu.core_type<tc>, window_params = [{transform_indices = @transform_0, window_bounds = array<i64: 8, 96>}, {transform_indices = @transform_1, window_bounds = array<i64: 8, 108>}, {transform_indices = @transform_2, window_bounds = array<i64: 8, 108>}, {transform_indices = @transform_3, window_bounds = array<i64: 8, 32>}, {transform_indices = @transform_4, window_bounds = array<i64: 1, 8, 128>}]} {
    %0 = tpu.iota {dimensions = array<i32: 1>} : vector<32x96xi32>
    %1 = tpu.iota {dimensions = array<i32: 0>} : vector<32x96xi32>
    %c3_i32 = arith.constant 3 : i32
    %2 = vector.broadcast %c3_i32 : i32 to vector<32x96xi32>
    %3 = arith.muli %1, %2 : vector<32x96xi32>
    %4 = arith.subi %0, %3 : vector<32x96xi32>
    %c0_i32 = arith.constant 0 : i32
    %5 = vector.broadcast %c0_i32 : i32 to vector<32x96xi32>
    %6 = arith.cmpi sge, %4, %5 : vector<32x96xi32>
    %c3_i32_0 = arith.constant 3 : i32
    %7 = vector.broadcast %c3_i32_0 : i32 to vector<32x96xi32>
    %8 = arith.cmpi slt, %4, %7 : vector<32x96xi32>
    %9 = arith.andi %6, %8 : vector<32x96xi1>
    %10 = arith.extui %9 : vector<32x96xi1> to vector<32x96xi32>
    %11 = arith.sitofp %10 : vector<32x96xi32> to vector<32x96xf32>
    %c0 = arith.constant 0 : index
    %c0_1 = arith.constant 0 : index
    %12 = vector.load %arg4[%c0, %c0_1] : memref<8x32xf32, #tpu.memory_space<vmem>>, vector<8x32xf32>
    %cst = arith.constant dense<0.000000e+00> : vector<8x96xf32>
    %13 = tpu.matmul %12, %11, %cst {dimension_numbers = #tpu.dot_dimension_numbers<[1], [0], [0], [1], [0, 0, 1, 1], [], []>} : vector<8x32xf32>, vector<32x96xf32>, vector<8x96xf32> -> vector<8x96xf32>
    %c0_2 = arith.constant 0 : index
    %c0_3 = arith.constant 0 : index
    %14 = vector.load %arg2[%c0_2, %c0_3] : memref<8x108xf32, #tpu.memory_space<vmem>>, vector<8x108xf32>
    %c0_4 = arith.constant 0 : index
    %c0_5 = arith.constant 0 : index
    %15 = vector.load %arg6[%c0_4, %c0_5] : memref<16x108xf32, #tpu.memory_space<vmem>>, vector<8x108xf32>
    tpu.vector_store %arg6[%c0_4, %c0_5], %14 {strides = array<i32>} : memref<16x108xf32, #tpu.memory_space<vmem>>, vector<8x108xf32>,
    %c0_6 = arith.constant 0 : index
    %c0_7 = arith.constant 0 : index
    %16 = vector.load %arg3[%c0_6, %c0_7] : memref<8x108xf32, #tpu.memory_space<vmem>>, vector<8x108xf32>
    %c8 = arith.constant 8 : index
    %c0_8 = arith.constant 0 : index
    %17 = vector.load %arg6[%c8, %c0_8] : memref<16x108xf32, #tpu.memory_space<vmem>>, vector<8x108xf32>
    tpu.vector_store %arg6[%c8, %c0_8], %16 {strides = array<i32>} : memref<16x108xf32, #tpu.memory_space<vmem>>, vector<8x108xf32>,
    %c0_9 = arith.constant 0 : index
    %c0_10 = arith.constant 0 : index
    %18 = vector.load %arg2[%c0_9, %c0_10] : memref<8x108xf32, #tpu.memory_space<vmem>>, vector<4x108xf32>
    %c1 = arith.constant 1 : index
    %c0_11 = arith.constant 0 : index
    %19 = vector.load %arg2[%c1, %c0_11] : memref<8x108xf32, #tpu.memory_space<vmem>>, vector<4x108xf32>
    %c2 = arith.constant 2 : index
    %c0_12 = arith.constant 0 : index
    %20 = vector.load %arg2[%c2, %c0_12] : memref<8x108xf32, #tpu.memory_space<vmem>>, vector<4x108xf32>
    %c3 = arith.constant 3 : index
    %c0_13 = arith.constant 0 : index
    %21 = vector.load %arg2[%c3, %c0_13] : memref<8x108xf32, #tpu.memory_space<vmem>>, vector<4x108xf32>
    %c4 = arith.constant 4 : index
    %c0_14 = arith.constant 0 : index
    %22 = vector.load %arg2[%c4, %c0_14] : memref<8x108xf32, #tpu.memory_space<vmem>>, vector<4x108xf32>
    %23 = arith.addf %18, %22 : vector<4x108xf32>
    %24 = arith.addf %19, %21 : vector<4x108xf32>
    %cst_15 = arith.constant -2.000000e+00 : f32
    %25 = vector.broadcast %cst_15 : f32 to vector<4x108xf32>
    %26 = arith.mulf %25, %23 : vector<4x108xf32>
    %27 = arith.addf %24, %20 : vector<4x108xf32>
    %cst_16 = arith.constant 4.000000e+00 : f32
    %28 = vector.broadcast %cst_16 : f32 to vector<4x108xf32>
    %29 = arith.mulf %28, %27 : vector<4x108xf32>
    %30 = arith.subf %26, %29 : vector<4x108xf32>
    %cst_17 = arith.constant 8.000000e+00 : f32
    %31 = vector.broadcast %cst_17 : f32 to vector<4x108xf32>
    %32 = arith.mulf %31, %20 : vector<4x108xf32>
    %cst_18 = arith.constant 4.000000e+00 : f32
    %33 = vector.broadcast %cst_18 : f32 to vector<4x108xf32>
    %34 = arith.mulf %33, %23 : vector<4x108xf32>
    %35 = arith.subf %32, %34 : vector<4x108xf32>
    %cst_19 = arith.constant 2.400000e+01 : f32
    %36 = vector.broadcast %cst_19 : f32 to vector<4x108xf32>
    %37 = arith.mulf %36, %20 : vector<4x108xf32>
    %cst_20 = arith.constant 8.000000e+00 : f32
    %38 = vector.broadcast %cst_20 : f32 to vector<4x108xf32>
    %39 = arith.mulf %38, %24 : vector<4x108xf32>
    %40 = arith.addf %37, %39 : vector<4x108xf32>
    %cst_21 = arith.constant 4.000000e+00 : f32
    %41 = vector.broadcast %cst_21 : f32 to vector<4x108xf32>
    %42 = arith.mulf %41, %23 : vector<4x108xf32>
    %43 = arith.subf %40, %42 : vector<4x108xf32>
    %44 = vector.extract_strided_slice %30 {offsets = [0, 0], sizes = [4, 96], strides = [1, 1]} : vector<4x108xf32> to vector<4x96xf32>
    %45 = vector.extract_strided_slice %35 {offsets = [0, 3], sizes = [4, 96], strides = [1, 1]} : vector<4x108xf32> to vector<4x96xf32>
    %46 = arith.addf %44, %45 : vector<4x96xf32>
    %47 = vector.extract_strided_slice %43 {offsets = [0, 6], sizes = [4, 96], strides = [1, 1]} : vector<4x108xf32> to vector<4x96xf32>
    %48 = arith.addf %46, %47 : vector<4x96xf32>
    %49 = vector.extract_strided_slice %35 {offsets = [0, 9], sizes = [4, 96], strides = [1, 1]} : vector<4x108xf32> to vector<4x96xf32>
    %50 = arith.addf %48, %49 : vector<4x96xf32>
    %51 = vector.extract_strided_slice %30 {offsets = [0, 12], sizes = [4, 96], strides = [1, 1]} : vector<4x108xf32> to vector<4x96xf32>
    %52 = arith.addf %50, %51 : vector<4x96xf32>
    %53 = vector.extract_strided_slice %20 {offsets = [0, 6], sizes = [4, 96], strides = [1, 1]} : vector<4x108xf32> to vector<4x96xf32>
    %c0_22 = arith.constant 0 : index
    %c0_23 = arith.constant 0 : index
    %54 = vector.load %arg1[%c0_22, %c0_23] : memref<8x96xf32, #tpu.memory_space<vmem>>, vector<4x96xf32>
    %55 = vector.extract_strided_slice %13 {offsets = [0, 0], sizes = [4, 96], strides = [1, 1]} : vector<8x96xf32> to vector<4x96xf32>
    %56 = arith.subf %54, %53 : vector<4x96xf32>
    %57 = arith.mulf %56, %56 : vector<4x96xf32>
    %58 = arith.mulf %52, %52 : vector<4x96xf32>
    %59 = arith.mulf %55, %55 : vector<4x96xf32>
    %cst_24 = arith.constant 1.000000e+00 : f32
    %60 = vector.broadcast %cst_24 : f32 to vector<4x96xf32>
    %61 = arith.subf %60, %55 : vector<4x96xf32>
    %62 = arith.mulf %61, %61 : vector<4x96xf32>
    %63 = arith.mulf %62, %57 : vector<4x96xf32>
    %64 = vector.shape_cast %63 : vector<4x96xf32> to vector<1x4x96xf32>
    %cst_25 = arith.constant dense<0.000000e+00> : vector<1xf32>
    %65 = vector.multi_reduction <add>, %64, %cst_25 [1, 2] : vector<1x4x96xf32> to vector<1xf32>
    %66 = vector.shape_cast %65 : vector<1xf32> to vector<1x1x1xf32>
    %67 = vector.extract %66[0, 0, 0] : f32 from vector<1x1x1xf32>
    %68 = arith.mulf %59, %58 : vector<4x96xf32>
    %69 = vector.shape_cast %68 : vector<4x96xf32> to vector<1x4x96xf32>
    %cst_26 = arith.constant dense<0.000000e+00> : vector<1xf32>
    %70 = vector.multi_reduction <add>, %69, %cst_26 [1, 2] : vector<1x4x96xf32> to vector<1xf32>
    %71 = vector.shape_cast %70 : vector<1xf32> to vector<1x1x1xf32>
    %72 = vector.extract %71[0, 0, 0] : f32 from vector<1x1x1xf32>
    %c4_27 = arith.constant 4 : index
    %c0_28 = arith.constant 0 : index
    %73 = vector.load %arg6[%c4_27, %c0_28] : memref<16x108xf32, #tpu.memory_space<vmem>>, vector<4x108xf32>
    %c5 = arith.constant 5 : index
    %c0_29 = arith.constant 0 : index
    %74 = vector.load %arg6[%c5, %c0_29] : memref<16x108xf32, #tpu.memory_space<vmem>>, vector<4x108xf32>
    %c6 = arith.constant 6 : index
    %c0_30 = arith.constant 0 : index
    %75 = vector.load %arg6[%c6, %c0_30] : memref<16x108xf32, #tpu.memory_space<vmem>>, vector<4x108xf32>
    %c7 = arith.constant 7 : index
    %c0_31 = arith.constant 0 : index
    %76 = vector.load %arg6[%c7, %c0_31] : memref<16x108xf32, #tpu.memory_space<vmem>>, vector<4x108xf32>
    %c8_32 = arith.constant 8 : index
    %c0_33 = arith.constant 0 : index
    %77 = vector.load %arg6[%c8_32, %c0_33] : memref<16x108xf32, #tpu.memory_space<vmem>>, vector<4x108xf32>
    %78 = arith.addf %73, %77 : vector<4x108xf32>
    %79 = arith.addf %74, %76 : vector<4x108xf32>
    %cst_34 = arith.constant -2.000000e+00 : f32
    %80 = vector.broadcast %cst_34 : f32 to vector<4x108xf32>
    %81 = arith.mulf %80, %78 : vector<4x108xf32>
    %82 = arith.addf %79, %75 : vector<4x108xf32>
    %cst_35 = arith.constant 4.000000e+00 : f32
    %83 = vector.broadcast %cst_35 : f32 to vector<4x108xf32>
    %84 = arith.mulf %83, %82 : vector<4x108xf32>
    %85 = arith.subf %81, %84 : vector<4x108xf32>
    %cst_36 = arith.constant 8.000000e+00 : f32
    %86 = vector.broadcast %cst_36 : f32 to vector<4x108xf32>
    %87 = arith.mulf %86, %75 : vector<4x108xf32>
    %cst_37 = arith.constant 4.000000e+00 : f32
    %88 = vector.broadcast %cst_37 : f32 to vector<4x108xf32>
    %89 = arith.mulf %88, %78 : vector<4x108xf32>
    %90 = arith.subf %87, %89 : vector<4x108xf32>
    %cst_38 = arith.constant 2.400000e+01 : f32
    %91 = vector.broadcast %cst_38 : f32 to vector<4x108xf32>
    %92 = arith.mulf %91, %75 : vector<4x108xf32>
    %cst_39 = arith.constant 8.000000e+00 : f32
    %93 = vector.broadcast %cst_39 : f32 to vector<4x108xf32>
    %94 = arith.mulf %93, %79 : vector<4x108xf32>
    %95 = arith.addf %92, %94 : vector<4x108xf32>
    %cst_40 = arith.constant 4.000000e+00 : f32
    %96 = vector.broadcast %cst_40 : f32 to vector<4x108xf32>
    %97 = arith.mulf %96, %78 : vector<4x108xf32>
    %98 = arith.subf %95, %97 : vector<4x108xf32>
    %99 = vector.extract_strided_slice %85 {offsets = [0, 0], sizes = [4, 96], strides = [1, 1]} : vector<4x108xf32> to vector<4x96xf32>
    %100 = vector.extract_strided_slice %90 {offsets = [0, 3], sizes = [4, 96], strides = [1, 1]} : vector<4x108xf32> to vector<4x96xf32>
    %101 = arith.addf %99, %100 : vector<4x96xf32>
    %102 = vector.extract_strided_slice %98 {offsets = [0, 6], sizes = [4, 96], strides = [1, 1]} : vector<4x108xf32> to vector<4x96xf32>
    %103 = arith.addf %101, %102 : vector<4x96xf32>
    %104 = vector.extract_strided_slice %90 {offsets = [0, 9], sizes = [4, 96], strides = [1, 1]} : vector<4x108xf32> to vector<4x96xf32>
    %105 = arith.addf %103, %104 : vector<4x96xf32>
    %106 = vector.extract_strided_slice %85 {offsets = [0, 12], sizes = [4, 96], strides = [1, 1]} : vector<4x108xf32> to vector<4x96xf32>
    %107 = arith.addf %105, %106 : vector<4x96xf32>
    %108 = vector.extract_strided_slice %75 {offsets = [0, 6], sizes = [4, 96], strides = [1, 1]} : vector<4x108xf32> to vector<4x96xf32>
    %c4_41 = arith.constant 4 : index
    %c0_42 = arith.constant 0 : index
    %109 = vector.load %arg1[%c4_41, %c0_42] : memref<8x96xf32, #tpu.memory_space<vmem>>, vector<4x96xf32>
    %110 = vector.extract_strided_slice %13 {offsets = [4, 0], sizes = [4, 96], strides = [1, 1]} : vector<8x96xf32> to vector<4x96xf32>
    %111 = arith.subf %109, %108 : vector<4x96xf32>
    %112 = arith.mulf %111, %111 : vector<4x96xf32>
    %113 = arith.mulf %107, %107 : vector<4x96xf32>
    %114 = arith.mulf %110, %110 : vector<4x96xf32>
    %cst_43 = arith.constant 1.000000e+00 : f32
    %115 = vector.broadcast %cst_43 : f32 to vector<4x96xf32>
    %116 = arith.subf %115, %110 : vector<4x96xf32>
    %117 = arith.mulf %116, %116 : vector<4x96xf32>
    %118 = arith.mulf %117, %112 : vector<4x96xf32>
    %119 = vector.shape_cast %118 : vector<4x96xf32> to vector<1x4x96xf32>
    %cst_44 = arith.constant dense<0.000000e+00> : vector<1xf32>
    %120 = vector.multi_reduction <add>, %119, %cst_44 [1, 2] : vector<1x4x96xf32> to vector<1xf32>
    %121 = vector.shape_cast %120 : vector<1xf32> to vector<1x1x1xf32>
    %122 = vector.extract %121[0, 0, 0] : f32 from vector<1x1x1xf32>
    %123 = arith.mulf %114, %113 : vector<4x96xf32>
    %124 = vector.shape_cast %123 : vector<4x96xf32> to vector<1x4x96xf32>
    %cst_45 = arith.constant dense<0.000000e+00> : vector<1xf32>
    %125 = vector.multi_reduction <add>, %124, %cst_45 [1, 2] : vector<1x4x96xf32> to vector<1xf32>
    %126 = vector.shape_cast %125 : vector<1xf32> to vector<1x1x1xf32>
    %127 = vector.extract %126[0, 0, 0] : f32 from vector<1x1x1xf32>
    %128 = arith.addf %67, %122 : f32
    %129 = arith.addf %72, %127 : f32
    %c0_46 = arith.constant 0 : index
    %c0_47 = arith.constant 0 : index
    %130 = vector.load %arg4[%c0_46, %c0_47] : memref<8x32xf32, #tpu.memory_space<vmem>>, vector<8x32xf32>
    %131 = vector.shape_cast %130 : vector<8x32xf32> to vector<1x8x32xf32>
    %cst_48 = arith.constant dense<0.000000e+00> : vector<1xf32>
    %132 = vector.multi_reduction <add>, %131, %cst_48 [1, 2] : vector<1x8x32xf32> to vector<1xf32>
    %133 = vector.shape_cast %132 : vector<1xf32> to vector<1x1x1xf32>
    %134 = vector.extract %133[0, 0, 0] : f32 from vector<1x1x1xf32>
    %135 = tpu.iota {dimensions = array<i32: 0>} : vector<8x128xi32>
    %c0_i32_49 = arith.constant 0 : i32
    %136 = vector.broadcast %c0_i32_49 : i32 to vector<8x128xi32>
    %137 = arith.cmpi eq, %135, %136 : vector<8x128xi32>
    %c1_i32 = arith.constant 1 : i32
    %138 = vector.broadcast %c1_i32 : i32 to vector<8x128xi32>
    %139 = arith.cmpi eq, %135, %138 : vector<8x128xi32>
    %c2_i32 = arith.constant 2 : i32
    %140 = vector.broadcast %c2_i32 : i32 to vector<8x128xi32>
    %141 = arith.cmpi eq, %135, %140 : vector<8x128xi32>
    %cst_50 = arith.constant 0.000000e+00 : f32
    %142 = vector.broadcast %134 : f32 to vector<8x128xf32>
    %143 = vector.broadcast %cst_50 : f32 to vector<8x128xf32>
    %144 = arith.select %141, %142, %143 : vector<8x128xi1>, vector<8x128xf32>
    %145 = vector.broadcast %129 : f32 to vector<8x128xf32>
    %146 = arith.select %139, %145, %144 : vector<8x128xi1>, vector<8x128xf32>
    %147 = vector.broadcast %128 : f32 to vector<8x128xf32>
    %148 = arith.select %137, %147, %146 : vector<8x128xi1>, vector<8x128xf32>
    %c0_51 = arith.constant 0 : index
    %c0_52 = arith.constant 0 : index
    %c0_53 = arith.constant 0 : index
    %149 = vector.load %arg5[%c0_51, %c0_52, %c0_53] : memref<1x8x128xf32, #tpu.memory_space<vmem>>, vector<1x8x128xf32>
    %150 = vector.shape_cast %149 : vector<1x8x128xf32> to vector<8x128xf32>
    %151 = vector.shape_cast %148 : vector<8x128xf32> to vector<1x8x128xf32>
    tpu.vector_store %arg5[%c0_51, %c0_52, %c0_53], %151 {strides = array<i32>} : memref<1x8x128xf32, #tpu.memory_space<vmem>>, vector<1x8x128xf32>,
    return
  }
  func.func @transform_0(%arg0: i32) -> (i32, i32) {
    %c0_i32 = arith.constant 0 : i32
    %c0_i32_0 = arith.constant 0 : i32
    return %arg0, %c0_i32 : i32, i32
  }
  func.func @transform_1(%arg0: i32) -> (i32, i32) {
    %c0_i32 = arith.constant 0 : i32
    %c0_i32_0 = arith.constant 0 : i32
    return %arg0, %c0_i32 : i32, i32
  }
  func.func @transform_2(%arg0: i32) -> (i32, i32) {
    %c1_i32 = arith.constant 1 : i32
    %0 = arith.addi %arg0, %c1_i32 : i32
    %c1_i32_0 = arith.constant 1 : i32
    %1 = arith.muli %0, %c1_i32_0 : i32
    %c0_i32 = arith.constant 0 : i32
    %c0_i32_1 = arith.constant 0 : i32
    return %1, %c0_i32 : i32, i32
  }
  func.func @transform_3(%arg0: i32) -> (i32, i32) {
    %c0_i32 = arith.constant 0 : i32
    %c0_i32_0 = arith.constant 0 : i32
    return %arg0, %c0_i32 : i32, i32
  }
  func.func @transform_4(%arg0: i32) -> (i32, i32, i32) {
    %c0_i32 = arith.constant 0 : i32
    %c0_i32_0 = arith.constant 0 : i32
    %c0_i32_1 = arith.constant 0 : i32
    return %arg0, %c0_i32, %c0_i32_0 : i32, i32, i32
  }
}

</mosaic_0001>

<llo_original>
// kernel: set_loss.1
$region0: #{set_loss.1}
  #allocation0 [shape = 'u32[]', space=smem, size = 0x4, offset = 0x4, fixed_abs, tag = 'smem constant byte address 0x4 - core index']
  #allocation1 [shape = 'u32[144,128]{1,0:T(1,128)}', space=vmem, size = 0x12000, scoped, tag = 'internal scratch']
  #allocation2 [shape = 'f32[16,108]{1,0:T(8,128)}', space=vmem, size = 0x2000, scoped, tag = 'scratch operand']
  %s0 = inlined_call_operand.vmem [shape: f32[32,96], index: 0, kind: input, shape index: {}]
  %s1 = inlined_call_operand.vmem [shape: f32[40,108], index: 1, kind: input, shape index: {}, may-alias: {1,2}]
  %s2 = inlined_call_operand.vmem [shape: f32[40,108], index: 2, kind: input, shape index: {}, may-alias: {1,2}]
  %s3 = inlined_call_operand.vmem [shape: f32[32,32], index: 3, kind: input, shape index: {}]
  %s4 = inlined_call_operand.vmem [shape: f32[4,8,128], index: 4, kind: output, shape index: {}]
  %s5 = sld [smem:[#allocation0]]
  $region49: #{set_loss.1} parent=0
    _
  %s7 = ssub.s32 1, %s5
  %s8 = scalar_select 0, %s7, %s5
  loop: start=0, step=1, limit=6
  $region2: #{set_loss.1} parent=0 // loop_pre_header
    _
  $region3: #{set_loss.1} parent=0 // loop_header
    %s10 = sphi 0, %s14
    %p11 = scmp.ge.s32.totalorder %s10, 6
    %s20 = sphi 0, %s22
    %s23 = sphi 0, %s20
    %s24 = sphi 0, %s23
    %s40 = sphi 0, %s24
    %s46 = sphi 0, %s48
    %s49 = sphi 0, %s46
    %s50 = sphi 0, %s49
    %s66 = sphi 0, %s50
    %s74 = sphi 0, %s76
    %s77 = sphi 0, %s74
    %s78 = sphi 0, %s77
    %s94 = sphi 0, %s78
    %s100 = sphi 0, %s102
    %s103 = sphi 0, %s100
    %s104 = sphi 0, %s103
    %s120 = sphi 0, %s104
    %s126 = sphi 0, %s128
    %s129 = sphi 0, %s126
    %s130 = sphi 0, %s129
    %s146 = sphi 0, %s130
  $region4: #{set_loss.1} parent=0 // loop_header_branch
    %13 = sbr.rel (%p11) target = $region8
  $region5: #{set_loss.1} parent=0 // loop_body
    %s15 = ssub.s32 %s10, 1
    %s16 = ssub.s32 %s10, 2
    %s17 = sadd.s32 %s10, 1
    %s18 = ssub.s32 %s10, %s17
    %p19 = scmp.eq.s32.totalorder %s18, 0
    %s21 = sadd.s32 %s20, 1
    %s22 = scalar_select %p19, %s20, %s21
    %p25 = pneg %p19
    %p26 = scmp.eq.s32.totalorder %s10, 3
    %p27 = por %p25, %p26
    %p28 = scmp.ne.s32.totalorder %s20, %s23
    %p29 = scmp.eq.s32.totalorder %s10, 0
    %p30 = por %p28, %p29
    %p31 = scmp.ne.s32.totalorder %s20, %s23
    %p32 = scmp.eq.s32.totalorder %s15, 3
    %p33 = por %p31, %p32
    %p34 = scmp.ne.s32.totalorder %s23, %s24
    %p35 = scmp.eq.s32.totalorder %s15, 0
    %p36 = por %p34, %p35
    %p37 = scmp.ne.s32.totalorder %s23, %s24
    %p38 = scmp.eq.s32.totalorder %s16, 3
    %p39 = por %p37, %p38
    %p41 = scmp.ne.s32.totalorder %s24, %s40
    %p42 = scmp.eq.s32.totalorder %s16, 0
    %p43 = por %p41, %p42
    %s44 = ssub.s32 %s10, %s17
    %p45 = scmp.eq.s32.totalorder %s44, 0
    %s47 = sadd.s32 %s46, 1
    %s48 = scalar_select %p45, %s46, %s47
    %p51 = pneg %p45
    %p52 = scmp.eq.s32.totalorder %s10, 3
    %p53 = por %p51, %p52
    %p54 = scmp.ne.s32.totalorder %s46, %s49
    %p55 = scmp.eq.s32.totalorder %s10, 0
    %p56 = por %p54, %p55
    %p57 = scmp.ne.s32.totalorder %s46, %s49
    %p58 = scmp.eq.s32.totalorder %s15, 3
    %p59 = por %p57, %p58
    %p60 = scmp.ne.s32.totalorder %s49, %s50
    %p61 = scmp.eq.s32.totalorder %s15, 0
    %p62 = por %p60, %p61
    %p63 = scmp.ne.s32.totalorder %s49, %s50
    %p64 = scmp.eq.s32.totalorder %s16, 3
    %p65 = por %p63, %p64
    %p67 = scmp.ne.s32.totalorder %s50, %s66
    %p68 = scmp.eq.s32.totalorder %s16, 0
    %p69 = por %p67, %p68
    %s70 = sadd.s32 %s10, 1
    %s71 = sadd.s32 %s17, 1
    %s72 = ssub.s32 %s70, %s71
    %p73 = scmp.eq.s32.totalorder %s72, 0
    %s75 = sadd.s32 %s74, 1
    %s76 = scalar_select %p73, %s74, %s75
    %p79 = pneg %p73
    %p80 = scmp.eq.s32.totalorder %s10, 3
    %p81 = por %p79, %p80
    %p82 = scmp.ne.s32.totalorder %s74, %s77
    %p83 = scmp.eq.s32.totalorder %s10, 0
    %p84 = por %p82, %p83
    %p85 = scmp.ne.s32.totalorder %s74, %s77
    %p86 = scmp.eq.s32.totalorder %s15, 3
    %p87 = por %p85, %p86
    %p88 = scmp.ne.s32.totalorder %s77, %s78
    %p89 = scmp.eq.s32.totalorder %s15, 0
    %p90 = por %p88, %p89
    %p91 = scmp.ne.s32.totalorder %s77, %s78
    %p92 = scmp.eq.s32.totalorder %s16, 3
    %p93 = por %p91, %p92
    %p95 = scmp.ne.s32.totalorder %s78, %s94
    %p96 = scmp.eq.s32.totalorder %s16, 0
    %p97 = por %p95, %p96
    %s98 = ssub.s32 %s10, %s17
    %p99 = scmp.eq.s32.totalorder %s98, 0
    %s101 = sadd.s32 %s100, 1
    %s102 = scalar_select %p99, %s100, %s101
    %p105 = pneg %p99
    %p106 = scmp.eq.s32.totalorder %s10, 3
    %p107 = por %p105, %p106
    %p108 = scmp.ne.s32.totalorder %s100, %s103
    %p109 = scmp.eq.s32.totalorder %s10, 0
    %p110 = por %p108, %p109
    %p111 = scmp.ne.s32.totalorder %s100, %s103
    %p112 = scmp.eq.s32.totalorder %s15, 3
    %p113 = por %p111, %p112
    %p114 = scmp.ne.s32.totalorder %s103, %s104
    %p115 = scmp.eq.s32.totalorder %s15, 0
    %p116 = por %p114, %p115
    %p117 = scmp.ne.s32.totalorder %s103, %s104
    %p118 = scmp.eq.s32.totalorder %s16, 3
    %p119 = por %p117, %p118
    %p121 = scmp.ne.s32.totalorder %s104, %s120
    %p122 = scmp.eq.s32.totalorder %s16, 0
    %p123 = por %p121, %p122
    %s124 = ssub.s32 %s10, %s17
    %p125 = scmp.eq.s32.totalorder %s124, 0
    %s127 = sadd.s32 %s126, 1
    %s128 = scalar_select %p125, %s126, %s127
    %p131 = pneg %p125
    %p132 = scmp.eq.s32.totalorder %s10, 3
    %p133 = por %p131, %p132
    %p134 = scmp.ne.s32.totalorder %s126, %s129
    %p135 = scmp.eq.s32.totalorder %s10, 0
    %p136 = por %p134, %p135
    %p137 = scmp.ne.s32.totalorder %s126, %s129
    %p138 = scmp.eq.s32.totalorder %s15, 3
    %p139 = por %p137, %p138
    %p140 = scmp.ne.s32.totalorder %s129, %s130
    %p141 = scmp.eq.s32.totalorder %s15, 0
    %p142 = por %p140, %p141
    %p143 = scmp.ne.s32.totalorder %s129, %s130
    %p144 = scmp.eq.s32.totalorder %s16, 3
    %p145 = por %p143, %p144
    %p147 = scmp.ne.s32.totalorder %s130, %s146
    %p148 = scmp.eq.s32.totalorder %s16, 0
    %p149 = por %p147, %p148
    %p150 = scmp.le.s32.totalorder 1, %s10
    %p151 = scmp.lt.s32.totalorder %s10, 5
    %p152 = pnand %p150, %p151
    %p153 = pneg %p152
    // Predicated region
    $region9: #{set_loss.1} parent=5 // pred_check
      _
    $region10: #{set_loss.1} parent=5 // pred_check_branch
      %155 = sbr.rel (%p152) target = $region12
    $region11: #{set_loss.1} parent=5 // pred_region
      %s156 = ssub.s32 %s10, 1
    $region12: #{set_loss.1} parent=5 // pred_fallthru
      _
    %p157 = scmp.lt.s32.totalorder %s10, 4
    // Predicated region
    $region13: #{set_loss.1} parent=5 // pred_check
      %p158 = pneg %p157
    $region14: #{set_loss.1} parent=5 // pred_check_branch
      %160 = sbr.rel (%p158) target = $region16
    $region15: #{set_loss.1} parent=5 // pred_region
      // Predicated region
      $region17: #{set_loss.1} parent=15 // pred_check
        %p161 = pneg %p30
      $region18: #{set_loss.1} parent=15 // pred_check_branch
        %163 = sbr.rel (%p161) target = $region20
      $region19: #{set_loss.1} parent=15 // pred_region
        %p164 = scmp.lt.s32.totalorder %s10, 3
        %s165 = scalar_select %p164, %s10, 3
        %s166 = smul.addr %s165, 8
        %s167 = scalar_lea.vmem %s0, %s166
      $region20: #{set_loss.1} parent=15 // pred_fallthru
        _
      // Predicated region
      $region21: #{set_loss.1} parent=15 // pred_check
        %p168 = pneg %p56
      $region22: #{set_loss.1} parent=15 // pred_check_branch
        %170 = sbr.rel (%p168) target = $region24
      $region23: #{set_loss.1} parent=15 // pred_region
        %p171 = scmp.lt.s32.totalorder %s10, 4
        %s172 = scalar_select %p171, %s10, 4
        %s173 = smul.addr %s172, 8
        %s174 = scalar_lea.vmem %s1, %s173
      $region24: #{set_loss.1} parent=15 // pred_fallthru
        _
      // Predicated region
      $region25: #{set_loss.1} parent=15 // pred_check
        %p175 = pneg %p84
      $region26: #{set_loss.1} parent=15 // pred_check_branch
        %177 = sbr.rel (%p175) target = $region28
      $region27: #{set_loss.1} parent=15 // pred_region
        %s178 = sadd.s32 %s10, 1
        %p179 = scmp.lt.s32.totalorder %s178, 4
        %s180 = scalar_select %p179, %s178, 4
        %s181 = smul.addr %s180, 8
        %s182 = scalar_lea.vmem %s2, %s181
        %s183 = sadd.s32 %s10, 1
      $region28: #{set_loss.1} parent=15 // pred_fallthru
        _
      // Predicated region
      $region29: #{set_loss.1} parent=15 // pred_check
        %p184 = pneg %p110
      $region30: #{set_loss.1} parent=15 // pred_check_branch
        %186 = sbr.rel (%p184) target = $region32
      $region31: #{set_loss.1} parent=15 // pred_region
        %p187 = scmp.lt.s32.totalorder %s10, 3
        %s188 = scalar_select %p187, %s10, 3
        %s189 = smul.addr %s188, 8
        %s190 = scalar_lea.vmem %s3, %s189
      $region32: #{set_loss.1} parent=15 // pred_fallthru
        _
    $region16: #{set_loss.1} parent=5 // pred_fallthru
      _
    %p191 = scmp.le.s32.totalorder 1, %s10
    %p192 = scmp.lt.s32.totalorder %s10, 5
    %p193 = pnand %p191, %p192
    %p194 = pneg %p193
    // Predicated region
    $region33: #{set_loss.1} parent=5 // pred_check
      _
    $region34: #{set_loss.1} parent=5 // pred_check_branch
      %196 = sbr.rel (%p193) target = $region36
    $region35: #{set_loss.1} parent=5 // pred_region
      %s197 = ssub.s32 %s10, 1
      %p198 = scmp.lt.s32.totalorder %s15, 3
      %s199 = scalar_select %p198, %s15, 3
      %s200 = smul.addr %s199, 8
      %s201 = scalar_lea.vmem %s0, %s200
      %p202 = pneg %p36
      %p203 = pneg %p33
      %p204 = scmp.lt.s32.totalorder %s15, 4
      %s205 = scalar_select %p204, %s15, 4
      %s206 = smul.addr %s205, 8
      %s207 = scalar_lea.vmem %s1, %s206
      %p208 = pneg %p62
      %p209 = pneg %p59
      %s210 = sadd.s32 %s15, 1
      %p211 = scmp.lt.s32.totalorder %s210, 4
      %s212 = scalar_select %p211, %s210, 4
      %s213 = smul.addr %s212, 8
      %s214 = scalar_lea.vmem %s2, %s213
      %p215 = pneg %p90
      %p216 = pneg %p87
      %p217 = scmp.lt.s32.totalorder %s15, 3
      %s218 = scalar_select %p217, %s15, 3
      %s219 = smul.addr %s218, 8
      %s220 = scalar_lea.vmem %s3, %s219
      %p221 = pneg %p116
      %p222 = pneg %p113
      %p223 = pneg %p142
      %p224 = pneg %p139
      %p225 = scmp.lt.s32.totalorder %s15, 3
      %s226 = scalar_select %p225, %s15, 3
      %s227 = smul.addr %s226, 8
      %s228 = scalar_lea.vmem %s4, %s227
      %p229 = scmp.lt.s32.totalorder %s15, 3
      %s230 = scalar_select %p229, %s15, 3
      %s231 = smul.addr %s230, 8
      %s232 = scalar_lea.vmem %s0, %s231
      %p233 = scmp.lt.s32.totalorder %s15, 4
      %s234 = scalar_select %p233, %s15, 4
      %s235 = smul.addr %s234, 8
      %s236 = scalar_lea.vmem %s1, %s235
      %s237 = sadd.s32 %s15, 1
      %p238 = scmp.lt.s32.totalorder %s237, 4
      %s239 = scalar_select %p238, %s237, 4
      %s240 = smul.addr %s239, 8
      %s241 = scalar_lea.vmem %s2, %s240
      %s242 = sadd.s32 %s15, 1
      %p243 = scmp.lt.s32.totalorder %s15, 3
      %s244 = scalar_select %p243, %s15, 3
      %s245 = smul.addr %s244, 8
      %s246 = scalar_lea.vmem %s3, %s245
      %p247 = scmp.lt.s32.totalorder %s15, 3
      %s248 = scalar_select %p247, %s15, 3
      %s249 = smul.addr %s248, 8
      %s250 = scalar_lea.vmem %s4, %s249
      %v251 = vlaneseq
      %v252 = vand.u32 %v251, 127
      %v253 = vlaneseq
      %v254 = vshrl.u32 %v253, 7
      %v255 = vadd.s32 %v254, 8
      %v256 = vadd.s32 %v254, 16
      %v257 = vadd.s32 %v254, 24
      %v258 = vmul.u32 %v254, 3
      %v259 = vmul.u32 %v255, 3
      %v260 = vmul.u32 %v256, 3
      %v261 = vmul.u32 %v257, 3
      %v262 = vsub.s32 %v252, %v258
      %v263 = vsub.s32 %v252, %v259
      %v264 = vsub.s32 %v252, %v260
      %v265 = vsub.s32 %v252, %v261
      %vm266 = vcmp.ge.s32.totalorder %v262, 0
      %vm267 = vcmp.ge.s32.totalorder %v263, 0
      %vm268 = vcmp.ge.s32.totalorder %v264, 0
      %vm269 = vcmp.ge.s32.totalorder %v265, 0
      %vm270 = vcmp.lt.s32.totalorder %v262, 3
      %vm271 = vcmp.lt.s32.totalorder %v263, 3
      %vm272 = vcmp.lt.s32.totalorder %v264, 3
      %vm273 = vcmp.lt.s32.totalorder %v265, 3
      %vm274 = vmand %vm266, %vm270
      %vm275 = vmand %vm267, %vm271
      %vm276 = vmand %vm268, %vm272
      %vm277 = vmand %vm269, %vm273
      %v278 = vsel %vm274, 1, 0
      %v279 = vsel %vm275, 1, 0
      %v280 = vsel %vm276, 1, 0
      %v281 = vsel %vm277, 1, 0
      %v282 = vcvt.s32.f32 %v278
      %v283 = vcvt.s32.f32 %v279
      %v284 = vcvt.s32.f32 %v280
      %v285 = vcvt.s32.f32 %v281
      %v286 = vld [vmem:[%s246] sm:$0xff]
      %vm287 = vcmask 261120
      %v289 = vsel %vm287, %v286, 0
      %291 = vmatprep.subr.mxu0 0.0
      %292 = vmatpush1.msra.mxu0 0.0
      %293 = vmatprep.subr.mxu0 0.0
      %294 = vmatpush1.msra.mxu0 0.0
      %295 = vmatprep.subr.mxu0 0.0
      %296 = vmatpush1.msra.mxu0 0.0
      %297 = vmatprep.subr.mxu0 0.0
      %298 = vmatpush1.msra.mxu0 0.0
      %299 = vmatprep.subr.mxu0 0.0
      %300 = vmatpush1.msra.mxu0 0.0
      %301 = vmatprep.subr.mxu0 0.0
      %302 = vmatpush1.msra.mxu0 0.0
      %303 = vmatprep.subr.mxu0 0.0
      %304 = vmatpush1.msra.mxu0 0.0
      %305 = vmatprep.subr.mxu0 0.0
      %306 = vmatpush1.msra.mxu0 0.0
      %307 = vmatprep.subr.mxu0 0.0
      %308 = vmatpush1.msra.mxu0 0.0
      %309 = vmatprep.subr.mxu0 0.0
      %310 = vmatpush1.msra.mxu0 0.0
      %311 = vmatprep.subr.mxu0 0.0
      %312 = vmatpush1.msra.mxu0 0.0
      %313 = vmatprep.subr.mxu0 0.0
      %314 = vmatpush1.msra.mxu0 0.0
      %315 = vmatprep.subr.mxu0 0.0
      %316 = vmatpush1.msra.mxu0 %v285
      %317 = vmatprep.subr.mxu0 0.0
      %318 = vmatpush1.msra.mxu0 %v284
      %319 = vmatprep.subr.mxu0 0.0
      %320 = vmatpush1.msra.mxu0 %v283
      %321 = vmatprep.subr.mxu0 0.0
      %322 = vmatpush1.msra.mxu0 %v282
      %323 = vmatprep.subr.mxu0 0.0
      %324 = vmatpush2.msra.mxu0 0.0
      %325 = vmatprep.subr.mxu0 0.0
      %326 = vmatpush2.msra.mxu0 0.0
      %327 = vmatprep.subr.mxu0 0.0
      %328 = vmatpush2.msra.mxu0 0.0
      %329 = vmatprep.subr.mxu0 0.0
      %330 = vmatpush2.msra.mxu0 0.0
      %331 = vmatprep.subr.mxu0 0.0
      %332 = vmatpush2.msra.mxu0 0.0
      %333 = vmatprep.subr.mxu0 0.0
      %334 = vmatpush2.msra.mxu0 0.0
      %335 = vmatprep.subr.mxu0 0.0
      %336 = vmatpush2.msra.mxu0 0.0
      %337 = vmatprep.subr.mxu0 0.0
      %338 = vmatpush2.msra.mxu0 0.0
      %339 = vmatprep.subr.mxu0 0.0
      %340 = vmatpush2.msra.mxu0 0.0
      %341 = vmatprep.subr.mxu0 0.0
      %342 = vmatpush2.msra.mxu0 0.0
      %343 = vmatprep.subr.mxu0 0.0
      %344 = vmatpush2.msra.mxu0 0.0
      %345 = vmatprep.subr.mxu0 0.0
      %346 = vmatpush2.msra.mxu0 0.0
      %347 = vmatprep.subr.mxu0 0.0
      %348 = vmatpush2.msra.mxu0 0.0
      %349 = vmatprep.subr.mxu0 0.0
      %350 = vmatpush2.msra.mxu0 0.0
      %351 = vmatprep.subr.mxu0 0.0
      %352 = vmatpush2.msra.mxu0 0.0
      %353 = vmatprep.subr.mxu0 0.0
      %354 = vmatpush2.msra.mxu0 0.0
      %355 = vmatprep.mubr.f32.mxu0 0.0
      %356 = vmatmul.mubr.f32.gmra.mxu0 %v289
      %v357 = vpop.f32.mrf.mxu0
      %v358 = vadd.f32 0.0, %v357
      %v359 = vpop.f32.mrf.mxu0
      %360 = vdwg.mxu0
      %v361 = vld [vmem:[%s236] sm:$0xff]
      %vm362 = vcmask 883712
      %363 = vst.msk [vmem:[#allocation2] sm:$0xff] %vm362, %v361
      %v364 = vld [vmem:[%s241] sm:$0xff]
      %365 = vst.msk [vmem:[#allocation2 + $0x8] sm:$0xff] %vm362, %v364
      %v366 = vld [vmem:[%s236] sm:$0xf]
      %v367 = vld [vmem:[%s236 + $0x1] sm:$0xf]
      %v368 = vld [vmem:[%s236 + $0x2] sm:$0xf]
      %v369 = vld [vmem:[%s236 + $0x3] sm:$0xf]
      %v370 = vld [vmem:[%s236 + $0x4] sm:$0xf]
      %v371 = vadd.f32 %v366, %v370
      %v372 = vadd.f32 %v367, %v369
      %v373 = vmul.f32 %v371, -2.0
      %v374 = vadd.f32 %v372, %v368
      %v375 = vmul.f32 %v374, 4.0
      %v376 = vsub.f32 %v373, %v375
      %v377 = vmul.f32 %v368, 8.0
      %v378 = vmul.f32 %v371, 4.0
      %v379 = vsub.f32 %v377, %v378
      %v380 = vmul.f32 %v368, 24.0
      %v381 = vmul.f32 %v372, 8.0
      %v382 = vadd.f32 %v380, %v381
      %v383 = vsub.f32 %v382, %v378
      %385 = vrot.lane.b32.xlu0 %v379, 125
      %v386 = vpop.permute.xlu0 %385
      %v388 = vadd.f32 %v376, %v386
      %390 = vrot.lane.b32.xlu0 %v383, 122
      %v391 = vpop.permute.xlu0 %390
      %v393 = vadd.f32 %v388, %v391
      %394 = vrot.lane.b32.xlu0 %v379, 119
      %v395 = vpop.permute.xlu0 %394
      %v397 = vadd.f32 %v393, %v395
      %399 = vrot.lane.b32.xlu0 %v376, 116
      %v400 = vpop.permute.xlu0 %399
      %v402 = vadd.f32 %v397, %v400
      %v403 = vld [vmem:[%s232] sm:$0xf]
      %405 = vrot.lane.b32.xlu0 %v368, 122
      %v406 = vpop.permute.xlu0 %405
      %v408 = vsub.f32 %v403, %v406
      %v409 = vmul.f32 %v408, %v408
      %v410 = vmul.f32 %v402, %v402
      %v411 = vmul.f32 %v358, %v358
      %v412 = vsub.f32 1.0, %v358
      %v413 = vmul.f32 %v412, %v412
      %v414 = vmul.f32 %v413, %v409
      %vm415 = vcmask 781312
      %v416 = vsel %vm415, %v414, 0.0
      %417 = vadd.xlane.f32.xlu0 %v416
      %v418 = vpop.xlane.xlu0 %417
      %v419 = vrot.slane %v418, 4
      %v420 = vadd.f32 %v418, %v419
      %v421 = vrot.slane %v420, 2
      %v422 = vadd.f32 %v420, %v421
      %v423 = vrot.slane %v422, 1
      %v424 = vadd.f32 %v422, %v423
      %s425 = vtos %v424
      %v426 = vmul.f32 %v411, %v410
      %v427 = vsel %vm415, %v426, 0.0
      %428 = vadd.xlane.f32.xlu0 %v427
      %v429 = vpop.xlane.xlu0 %428
      %v430 = vrot.slane %v429, 4
      %v431 = vadd.f32 %v429, %v430
      %v432 = vrot.slane %v431, 2
      %v433 = vadd.f32 %v431, %v432
      %v434 = vrot.slane %v433, 1
      %v435 = vadd.f32 %v433, %v434
      %s436 = vtos %v435
      %v437 = vld [vmem:[#allocation2 + $0x4] sm:$0xf]
      %v438 = vld [vmem:[#allocation2 + $0x5] sm:$0xf]
      %v439 = vld [vmem:[#allocation2 + $0x6] sm:$0xf]
      %v440 = vld [vmem:[#allocation2 + $0x7] sm:$0xf]
      %v441 = vld [vmem:[#allocation2 + $0x8] sm:$0xf]
      %v442 = vadd.f32 %v437, %v441
      %v443 = vadd.f32 %v438, %v440
      %v444 = vmul.f32 %v442, -2.0
      %v445 = vadd.f32 %v443, %v439
      %v446 = vmul.f32 %v445, 4.0
      %v447 = vsub.f32 %v444, %v446
      %v448 = vmul.f32 %v439, 8.0
      %v449 = vmul.f32 %v442, 4.0
      %v450 = vsub.f32 %v448, %v449
      %v451 = vmul.f32 %v439, 24.0
      %v452 = vmul.f32 %v443, 8.0
      %v453 = vadd.f32 %v451, %v452
      %v454 = vsub.f32 %v453, %v449
      %456 = vrot.lane.b32.xlu0 %v450, 125
      %v457 = vpop.permute.xlu0 %456
      %v459 = vadd.f32 %v447, %v457
      %461 = vrot.lane.b32.xlu0 %v454, 122
      %v462 = vpop.permute.xlu0 %461
      %v464 = vadd.f32 %v459, %v462
      %465 = vrot.lane.b32.xlu0 %v450, 119
      %v466 = vpop.permute.xlu0 %465
      %v468 = vadd.f32 %v464, %v466
      %470 = vrot.lane.b32.xlu0 %v447, 116
      %v471 = vpop.permute.xlu0 %470
      %v473 = vadd.f32 %v468, %v471
      %v474 = vld [vmem:[%s232 + $0x4] sm:$0xf]
      %476 = vrot.lane.b32.xlu0 %v439, 122
      %v477 = vpop.permute.xlu0 %476
      %v479 = vsub.f32 %v474, %v477
      %v480 = vmul.f32 %v479, %v479
      %v481 = vmul.f32 %v473, %v473
      %v483 = vrot.slane %v480, 4
      %v485 = vmul.f32 %v413, %v483
      %v487 = vrot.slane %v485, 4
      %v489 = vsel %vm415, %v487, 0.0
      %490 = vadd.xlane.f32.xlu0 %v489
      %v491 = vpop.xlane.xlu0 %490
      %v492 = vrot.slane %v491, 4
      %v493 = vadd.f32 %v491, %v492
      %v494 = vrot.slane %v493, 2
      %v495 = vadd.f32 %v493, %v494
      %v496 = vrot.slane %v495, 1
      %v497 = vadd.f32 %v495, %v496
      %s498 = vtos %v497
      %v500 = vrot.slane %v481, 4
      %v502 = vmul.f32 %v411, %v500
      %v504 = vrot.slane %v502, 4
      %v506 = vsel %vm415, %v504, 0.0
      %507 = vadd.xlane.f32.xlu0 %v506
      %v508 = vpop.xlane.xlu0 %507
      %v509 = vrot.slane %v508, 4
      %v510 = vadd.f32 %v508, %v509
      %v511 = vrot.slane %v510, 2
      %v512 = vadd.f32 %v510, %v511
      %v513 = vrot.slane %v512, 1
      %v514 = vadd.f32 %v512, %v513
      %s515 = vtos %v514
      %s516 = sadd.f32 %s425, %s498
      %s517 = sadd.f32 %s436, %s515
      %v518 = vld [vmem:[%s246] sm:$0xff]
      %v519 = vsel %vm287, %v518, 0.0
      %520 = vadd.xlane.f32.xlu0 %v519
      %v521 = vpop.xlane.xlu0 %520
      %v522 = vrot.slane %v521, 4
      %v523 = vadd.f32 %v521, %v522
      %v524 = vrot.slane %v523, 2
      %v525 = vadd.f32 %v523, %v524
      %v526 = vrot.slane %v525, 1
      %v527 = vadd.f32 %v525, %v526
      %s528 = vtos %v527
      %vm529 = vcmp.eq.s32.totalorder %v254, 0
      %vm530 = vcmp.eq.s32.totalorder %v254, 1
      %vm531 = vcmp.eq.s32.totalorder %v254, 2
      %v532 = vstv %s528
      %v533 = vsel %vm531, %v532, 0.0
      %v534 = vstv %s517
      %v535 = vsel %vm530, %v534, %v533
      %v536 = vstv %s516
      %v537 = vsel %vm529, %v536, %v535
      %538 = vst [vmem:[%s250] sm:$0xff] %v537
      %p539 = scmp.lt.s32.totalorder %s15, 3
      %s540 = scalar_select %p539, %s15, 3
      %s541 = smul.addr %s540, 8
      %s542 = scalar_lea.vmem %s4, %s541
      // Predicated region
      $region37: #{set_loss.1} parent=35 // pred_check
        %p543 = pneg %p139
      $region38: #{set_loss.1} parent=35 // pred_check_branch
        %545 = sbr.rel (%p543) target = $region40
      $region39: #{set_loss.1} parent=35 // pred_region
        _
      $region40: #{set_loss.1} parent=35 // pred_fallthru
        _
    $region36: #{set_loss.1} parent=5 // pred_fallthru
      _
    %p546 = scmp.le.s32.totalorder 2, %s10
    // Predicated region
    $region41: #{set_loss.1} parent=5 // pred_check
      %p547 = pneg %p546
    $region42: #{set_loss.1} parent=5 // pred_check_branch
      %549 = sbr.rel (%p547) target = $region44
    $region43: #{set_loss.1} parent=5 // pred_region
      %s550 = ssub.s32 %s10, 2
      // Predicated region
      $region45: #{set_loss.1} parent=43 // pred_check
        %p551 = pneg %p145
      $region46: #{set_loss.1} parent=43 // pred_check_branch
        %553 = sbr.rel (%p551) target = $region48
      $region47: #{set_loss.1} parent=43 // pred_region
        %p554 = scmp.lt.s32.totalorder %s16, 3
        %s555 = scalar_select %p554, %s16, 3
        %s556 = smul.addr %s555, 8
        %s557 = scalar_lea.vmem %s4, %s556
      $region48: #{set_loss.1} parent=43 // pred_fallthru
        _
    $region44: #{set_loss.1} parent=5 // pred_fallthru
      _
  $region6: #{set_loss.1} parent=0 // loop_footer
    %s14 = sadd.s32 1, %s10
  $region7: #{set_loss.1} parent=0 // loop_footer_branch
    %9 = sbr.rel target = $region3
  $region8: #{set_loss.1} parent=0 // loop_exit
    _

</llo_original>
